<compile_context>
chip_gen: v6e
topology: v6e:2x2x1
jax: 0.10.0
libtpu: 0.0.40
codegen_flags: <defaults>
</compile_context>

<pallas_src>
import math

import jax
import jax.numpy as jnp
from jax.experimental import pallas as pl
from jax.experimental.pallas import tpu as pltpu

# ------------------------- configuration ---------------------------------
NUM_JOINTS = 4
JOINT_DIMS = 3
WINDOW_SIZE = 4
INPUT_DIM = NUM_JOINTS * JOINT_DIMS * WINDOW_SIZE          # 48
HIDDEN_SIZES = [64, 32]
LATENT_DIM = 16
ACTIVATION = "Tanh"                                        # nn.Tanh()
Z_PRIOR_MEAN = 0.0
Z_PRIOR_STD = 1.0

ENC_SIZES = [INPUT_DIM] + HIDDEN_SIZES                     # [48, 64, 32]
DEC_SIZES = [LATENT_DIM] + HIDDEN_SIZES[::-1]              # [16, 32, 64]
N_ENC = len(ENC_SIZES) - 1
N_DEC = len(DEC_SIZES) - 1

# Folded (2 batch rows per kernel row) widths.
XF_DIM = 2 * INPUT_DIM                                     # 96
PACK_F = 2 * INPUT_DIM + 4 * LATENT_DIM                    # 160: xgen|mean|std folded
MAX_BATCH_TILE = 2048                                      # rows per grid step


def _act(x):
    if ACTIVATION == "Tanh":
        return jnp.tanh(x)
    elif ACTIVATION == "ReLU":
        return jnp.maximum(x, 0.0)
    else:
        raise ValueError(ACTIVATION)


def _softplus(x):
    # Matches torch.nn.Softplus(beta=1, threshold=20).
    return jnp.where(x > 20.0, x, jnp.log1p(jnp.exp(jnp.minimum(x, 20.0))))


def _round_up(n, m):
    return ((n + m - 1) // m) * m


def _choose_tile(batch, tb_max):
    """Batch tile: multiple of 16, >= 16, and >= 2 grid steps when possible."""
    tb_max = max(16, (int(tb_max) // 16) * 16)
    b16 = _round_up(max(int(batch), 1), 16)
    tb = min(tb_max, b16)
    if tb >= b16 and b16 >= 32:          # would be a single tile -> split in two
        tb = _round_up(b16 // 2, 16)     # keeps v7x megacore sharding engaged
    return tb


# ------------------------------ kernel ------------------------------------
def vae_kernel(*refs):
    # refs layout (all VMEM, weights already 2x2 block-diagonal / bias tiled):
    #   [x_folded_tile,
    #    enc_w0, enc_b0, ..., enc_w{N_ENC-1}, enc_b{N_ENC-1},
    #    w_latent (fused mean|std, block-diag, reordered), b_latent,
    #    dec_w0, dec_b0, ..., dec_w{N_DEC-1}, dec_b{N_DEC-1},
    #    wo, bo,
    #    packed_out]
    n_in = 1 + 2 * N_ENC + 2 + 2 * N_DEC + 2
    ins = refs[:n_in]
    out_ref = refs[n_in]

    i = 0
    h = ins[i][...]; i += 1                      # folded x tile: [TBH, 2*INPUT_DIM]

    # ---- encoder (block-diagonal weights act on both batch halves at once) ----
    for _ in range(N_ENC):
        w = ins[i][...]; b = ins[i + 1][...]; i += 2
        h = _act(jnp.dot(h, w, preferred_element_type=jnp.float32) + b)

    # ---- fused latent heads: columns = [mean_h0 | mean_h1 | stdpre_h0 | stdpre_h1]
    w_lat = ins[i][...]; b_lat = ins[i + 1][...]; i += 2
    lat = jnp.dot(h, w_lat, preferred_element_type=jnp.float32) + b_lat
    zf = lat[:, : 2 * LATENT_DIM]                            # folded mean == folded z
    stdf = _softplus(lat[:, 2 * LATENT_DIM: 4 * LATENT_DIM])  # folded std

    # eval mode: zpost_samples = dist.mean
    d = zf

    # ---- decoder ----
    for _ in range(N_DEC):
        w = ins[i][...]; b = ins[i + 1][...]; i += 2
        d = _act(jnp.dot(d, w, preferred_element_type=jnp.float32) + b)

    # ---- output head ----
    wo = ins[i][...]; bo = ins[i + 1][...]; i += 2
    xgenf = jnp.dot(d, wo, preferred_element_type=jnp.float32) + bo   # [TBH, 96]

    # ---- packed writeback: direct sub-slice stores, whole 160-lane block covered
    out_ref[:, 0:2 * INPUT_DIM] = xgenf
    out_ref[:, 2 * INPUT_DIM:2 * INPUT_DIM + 2 * LATENT_DIM] = zf
    out_ref[:, 2 * INPUT_DIM + 2 * LATENT_DIM:PACK_F] = stdf


# ------------------------------ wrapper ------------------------------------
def _blockdiag2(w):
    z = jnp.zeros_like(w)
    return jnp.concatenate(
        [jnp.concatenate([w, z], axis=1), jnp.concatenate([z, w], axis=1)], axis=0)


def _tile2(b):
    return jnp.concatenate([b, b]).reshape(1, -1)


def vae_forward(x, params, tb_max=MAX_BATCH_TILE):
    """x: [B, INPUT_DIM] float32. params: dict of pre-transposed weights.

    Returns (x_gen, z, mean, std). In a fused downstream pipeline one would
    consume the packed slab directly instead of paying for the un-fold slices.
    """
    B = x.shape[0]
    TB = _choose_tile(B, tb_max)                 # multiple of 16
    B_pad = _round_up(B, TB)
    if B_pad != B:
        x = jnp.pad(x, ((0, B_pad - B), (0, 0)))

    TBH = TB // 2                                # folded tile height (mult of 8)
    BF = B_pad // 2
    xf = x.reshape(BF, XF_DIM)                   # fold 2 rows onto the lane axis

    inputs = [xf]
    in_specs = [pl.BlockSpec((TBH, XF_DIM), lambda i: (i, 0))]

    def add_resident(arr):
        # Full-array block, constant index map -> stays VMEM-resident across grid.
        inputs.append(arr)
        in_specs.append(pl.BlockSpec(arr.shape, lambda i: (0, 0)))

    # Weight prep (block-diagonal fold) — tiny; would be precomputed once in
    # a real deployment.
    for w, b in params["enc"]:
        add_resident(_blockdiag2(w))
        add_resident(_tile2(b))

    # Fused latent heads, block-diagonal, column order
    # [mean_h0 | mean_h1 | stdpre_h0 | stdpre_h1].
    wm, ws = params["wm"], params["ws"]
    zl = jnp.zeros_like(wm)
    w_lat = jnp.concatenate(
        [jnp.concatenate([wm, zl], axis=0),
         jnp.concatenate([zl, wm], axis=0),
         jnp.concatenate([ws, zl], axis=0),
         jnp.concatenate([zl, ws], axis=0)], axis=1)          # (2*32, 4*LATENT)
    b_lat = jnp.concatenate(
        [params["bm"], params["bm"], params["bs"], params["bs"]]).reshape(1, -1)
    add_resident(w_lat)
    add_resident(b_lat)

    for w, b in params["dec"]:
        add_resident(_blockdiag2(w))
        add_resident(_tile2(b))

    add_resident(_blockdiag2(params["wo"]))
    add_resident(_tile2(params["bo"]))

    grid = (BF // TBH,)
    packed = pl.pallas_call(
        vae_kernel,
        grid=grid,
        in_specs=in_specs,
        out_specs=pl.BlockSpec((TBH, PACK_F), lambda i: (i, 0)),
        out_shape=jax.ShapeDtypeStruct((BF, PACK_F), jnp.float32),
        compiler_params=pltpu.CompilerParams(
            dimension_semantics=("parallel",),        # megacore sharding on v7x
            vmem_limit_bytes=32 * 1024 * 1024,        # safe on v5e/v6e/v7x
        ),
    )(*inputs)

    # Un-fold with row-major reshapes, then trim batch padding.
    x_gen = packed[:, :2 * INPUT_DIM].reshape(B_pad, INPUT_DIM)[:B]
    mean = packed[:, 2 * INPUT_DIM:2 * INPUT_DIM + 2 * LATENT_DIM
                  ].reshape(B_pad, LATENT_DIM)[:B]
    std = packed[:, 2 * INPUT_DIM + 2 * LATENT_DIM:PACK_F
                 ].reshape(B_pad, LATENT_DIM)[:B]
    z = mean                                     # eval mode: z == posterior mean
    return x_gen, z, mean, std


# ------------------------ parameter init (deterministic) -------------------
def _init_linear(key, fan_in, fan_out):
    # PyTorch nn.Linear default: U(-1/sqrt(fan_in), 1/sqrt(fan_in)).
    kw, kb = jax.random.split(key)
    bound = 1.0 / math.sqrt(fan_in)
    # Stored already transposed to [fan_in, fan_out].
    w = jax.random.uniform(kw, (fan_in, fan_out), jnp.float32, -bound, bound)
    b = jax.random.uniform(kb, (fan_out,), jnp.float32, -bound, bound)
    return w, b


def make_params(key):
    keys = jax.random.split(key, N_ENC + N_DEC + 3)
    ki = 0
    enc = []
    for i in range(N_ENC):
        enc.append(_init_linear(keys[ki], ENC_SIZES[i], ENC_SIZES[i + 1])); ki += 1
    wm, bm = _init_linear(keys[ki], ENC_SIZES[-1], LATENT_DIM); ki += 1
    ws, bs = _init_linear(keys[ki], ENC_SIZES[-1], LATENT_DIM); ki += 1
    dec = []
    for i in range(N_DEC):
        dec.append(_init_linear(keys[ki], DEC_SIZES[i], DEC_SIZES[i + 1])); ki += 1
    wo, bo = _init_linear(keys[ki], DEC_SIZES[-1], INPUT_DIM); ki += 1
    return dict(enc=enc, wm=wm, bm=bm, ws=ws, bs=bs, dec=dec, wo=wo, bo=bo)


# ------------------------ pure-JAX reference -------------------------------
def _mm(a, b):
    return jnp.dot(a, b, precision=jax.lax.Precision.HIGHEST)


def vae_reference(x, p):
    h = x
    for w, b in p["enc"]:
        h = _act(_mm(h, w) + b)
    mean = _mm(h, p["wm"]) + p["bm"]
    std = _softplus(_mm(h, p["ws"]) + p["bs"])
    z = mean
    d = z
    for w, b in p["dec"]:
        d = _act(_mm(d, w) + b)
    xgen = _mm(d, p["wo"]) + p["bo"]
    return xgen, z, mean, std


def _check(x, params, **kw):
    outs = jax.block_until_ready(vae_forward(x, params, **kw))
    x_gen, z, z_mean, z_std = outs
    refs = vae_reference(x, params)
    for got, ref in zip(outs, refs):
        err = float(jnp.max(jnp.abs(got - ref)))
        assert jnp.allclose(got, ref, atol=1e-4, rtol=1e-3), err
    assert x_gen.shape == (x.shape[0], INPUT_DIM)
    assert z.shape == (x.shape[0], LATENT_DIM)
    assert z_mean.shape == (x.shape[0], LATENT_DIM)
    assert z_std.shape == (x.shape[0], LATENT_DIM)
    return outs


# --------------------------------- main ------------------------------------
if __name__ == "__main__":
    key = jax.random.PRNGKey(0)
    kx, kx2, kx3, kp = jax.random.split(key, 4)
    params = make_params(kp)

    # Small batch (padded up to one 16-row / 8-folded-row tile, grid=(1,)).
    x = jax.random.normal(kx, (2, INPUT_DIM), jnp.float32)
    _check(x, params)

    # Batch with multiple grid steps + padding (TB capped -> grid=(2,)).
    x2 = jax.random.normal(kx2, (20, INPUT_DIM), jnp.float32)
    _check(x2, params, tb_max=32)

    # Larger batch exercising >2 grid steps with trailing padding.
    x3 = jax.random.normal(kx3, (300, INPUT_DIM), jnp.float32)
    _check(x3, params, tb_max=128)

    print("KERNEL_OK")
</pallas_src>

<mosaic_0001>
module attributes {stable_mosaic.version = 11 : i64} {
  func.func @vae_kernel(%arg0: i32, %arg1: memref<8x96xf32, #tpu.memory_space<vmem>>, %arg2: memref<96x128xf32, #tpu.memory_space<vmem>>, %arg3: memref<1x128xf32, #tpu.memory_space<vmem>>, %arg4: memref<128x64xf32, #tpu.memory_space<vmem>>, %arg5: memref<1x64xf32, #tpu.memory_space<vmem>>, %arg6: memref<64x64xf32, #tpu.memory_space<vmem>>, %arg7: memref<1x64xf32, #tpu.memory_space<vmem>>, %arg8: memref<32x64xf32, #tpu.memory_space<vmem>>, %arg9: memref<1x64xf32, #tpu.memory_space<vmem>>, %arg10: memref<64x128xf32, #tpu.memory_space<vmem>>, %arg11: memref<1x128xf32, #tpu.memory_space<vmem>>, %arg12: memref<128x96xf32, #tpu.memory_space<vmem>>, %arg13: memref<1x96xf32, #tpu.memory_space<vmem>>, %arg14: memref<8x160xf32, #tpu.memory_space<vmem>>) attributes {dimension_semantics = [#tpu.dimension_semantics<parallel>], iteration_bounds = array<i64: 1>, scalar_prefetch = 0 : i64, scratch_operands = 0 : i64, tpu.core_type = #tpu.core_type<tc>, window_params = [{transform_indices = @transform_0, window_bounds = array<i64: 8, 96>}, {pipeline_mode = #tpu.pipeline_mode<synchronous>, transform_indices = @transform_1, window_bounds = array<i64: 96, 128>}, {pipeline_mode = #tpu.pipeline_mode<synchronous>, transform_indices = @transform_2, window_bounds = array<i64: 1, 128>}, {pipeline_mode = #tpu.pipeline_mode<synchronous>, transform_indices = @transform_3, window_bounds = array<i64: 128, 64>}, {pipeline_mode = #tpu.pipeline_mode<synchronous>, transform_indices = @transform_4, window_bounds = array<i64: 1, 64>}, {pipeline_mode = #tpu.pipeline_mode<synchronous>, transform_indices = @transform_5, window_bounds = array<i64: 64, 64>}, {pipeline_mode = #tpu.pipeline_mode<synchronous>, transform_indices = @transform_6, window_bounds = array<i64: 1, 64>}, {pipeline_mode = #tpu.pipeline_mode<synchronous>, transform_indices = @transform_7, window_bounds = array<i64: 32, 64>}, {pipeline_mode = #tpu.pipeline_mode<synchronous>, transform_indices = @transform_8, window_bounds = array<i64: 1, 64>}, {pipeline_mode = #tpu.pipeline_mode<synchronous>, transform_indices = @transform_9, window_bounds = array<i64: 64, 128>}, {pipeline_mode = #tpu.pipeline_mode<synchronous>, transform_indices = @transform_10, window_bounds = array<i64: 1, 128>}, {pipeline_mode = #tpu.pipeline_mode<synchronous>, transform_indices = @transform_11, window_bounds = array<i64: 128, 96>}, {pipeline_mode = #tpu.pipeline_mode<synchronous>, transform_indices = @transform_12, window_bounds = array<i64: 1, 96>}, {transform_indices = @transform_13, window_bounds = array<i64: 8, 160>}]} {
    %c0 = arith.constant 0 : index
    %c0_0 = arith.constant 0 : index
    %0 = vector.load %arg1[%c0, %c0_0] : memref<8x96xf32, #tpu.memory_space<vmem>>, vector<8x96xf32>
    %c0_1 = arith.constant 0 : index
    %c0_2 = arith.constant 0 : index
    %1 = vector.load %arg2[%c0_1, %c0_2] : memref<96x128xf32, #tpu.memory_space<vmem>>, vector<96x128xf32>
    %c0_3 = arith.constant 0 : index
    %c0_4 = arith.constant 0 : index
    %2 = vector.load %arg3[%c0_3, %c0_4] : memref<1x128xf32, #tpu.memory_space<vmem>>, vector<1x128xf32>
    %cst = arith.constant dense<0.000000e+00> : vector<8x128xf32>
    %3 = tpu.matmul %0, %1, %cst {dimension_numbers = #tpu.dot_dimension_numbers<[1], [0], [0], [1], [0, 0, 1, 1], [], []>} : vector<8x96xf32>, vector<96x128xf32>, vector<8x128xf32> -> vector<8x128xf32>
    %4 = vector.broadcast %2 : vector<1x128xf32> to vector<8x128xf32>
    %5 = arith.addf %3, %4 : vector<8x128xf32>
    %6 = math.tanh %5 : vector<8x128xf32>
    %c0_5 = arith.constant 0 : index
    %c0_6 = arith.constant 0 : index
    %7 = vector.load %arg4[%c0_5, %c0_6] : memref<128x64xf32, #tpu.memory_space<vmem>>, vector<128x64xf32>
    %c0_7 = arith.constant 0 : index
    %c0_8 = arith.constant 0 : index
    %8 = vector.load %arg5[%c0_7, %c0_8] : memref<1x64xf32, #tpu.memory_space<vmem>>, vector<1x64xf32>
    %cst_9 = arith.constant dense<0.000000e+00> : vector<8x64xf32>
    %9 = tpu.matmul %6, %7, %cst_9 {dimension_numbers = #tpu.dot_dimension_numbers<[1], [0], [0], [1], [0, 0, 1, 1], [], []>} : vector<8x128xf32>, vector<128x64xf32>, vector<8x64xf32> -> vector<8x64xf32>
    %10 = vector.broadcast %8 : vector<1x64xf32> to vector<8x64xf32>
    %11 = arith.addf %9, %10 : vector<8x64xf32>
    %12 = math.tanh %11 : vector<8x64xf32>
    %c0_10 = arith.constant 0 : index
    %c0_11 = arith.constant 0 : index
    %13 = vector.load %arg6[%c0_10, %c0_11] : memref<64x64xf32, #tpu.memory_space<vmem>>, vector<64x64xf32>
    %c0_12 = arith.constant 0 : index
    %c0_13 = arith.constant 0 : index
    %14 = vector.load %arg7[%c0_12, %c0_13] : memref<1x64xf32, #tpu.memory_space<vmem>>, vector<1x64xf32>
    %cst_14 = arith.constant dense<0.000000e+00> : vector<8x64xf32>
    %15 = tpu.matmul %12, %13, %cst_14 {dimension_numbers = #tpu.dot_dimension_numbers<[1], [0], [0], [1], [0, 0, 1, 1], [], []>} : vector<8x64xf32>, vector<64x64xf32>, vector<8x64xf32> -> vector<8x64xf32>
    %16 = vector.broadcast %14 : vector<1x64xf32> to vector<8x64xf32>
    %17 = arith.addf %15, %16 : vector<8x64xf32>
    %18 = vector.extract_strided_slice %17 {offsets = [0, 0], sizes = [8, 32], strides = [1, 1]} : vector<8x64xf32> to vector<8x32xf32>
    %19 = vector.extract_strided_slice %17 {offsets = [0, 32], sizes = [8, 32], strides = [1, 1]} : vector<8x64xf32> to vector<8x32xf32>
    %cst_15 = arith.constant 2.000000e+01 : f32
    %20 = vector.broadcast %cst_15 : f32 to vector<8x32xf32>
    %21 = arith.cmpf ogt, %19, %20 : vector<8x32xf32>
    %cst_16 = arith.constant 2.000000e+01 : f32
    %22 = vector.broadcast %cst_16 : f32 to vector<8x32xf32>
    %23 = arith.minimumf %19, %22 : vector<8x32xf32>
    %24 = math.exp %23 : vector<8x32xf32>
    %25 = math.log1p %24 : vector<8x32xf32>
    %26 = arith.select %21, %19, %25 : vector<8x32xi1>, vector<8x32xf32>
    %c0_17 = arith.constant 0 : index
    %c0_18 = arith.constant 0 : index
    %27 = vector.load %arg8[%c0_17, %c0_18] : memref<32x64xf32, #tpu.memory_space<vmem>>, vector<32x64xf32>
    %c0_19 = arith.constant 0 : index
    %c0_20 = arith.constant 0 : index
    %28 = vector.load %arg9[%c0_19, %c0_20] : memref<1x64xf32, #tpu.memory_space<vmem>>, vector<1x64xf32>
    %cst_21 = arith.constant dense<0.000000e+00> : vector<8x64xf32>
    %29 = tpu.matmul %18, %27, %cst_21 {dimension_numbers = #tpu.dot_dimension_numbers<[1], [0], [0], [1], [0, 0, 1, 1], [], []>} : vector<8x32xf32>, vector<32x64xf32>, vector<8x64xf32> -> vector<8x64xf32>
    %30 = vector.broadcast %28 : vector<1x64xf32> to vector<8x64xf32>
    %31 = arith.addf %29, %30 : vector<8x64xf32>
    %32 = math.tanh %31 : vector<8x64xf32>
    %c0_22 = arith.constant 0 : index
    %c0_23 = arith.constant 0 : index
    %33 = vector.load %arg10[%c0_22, %c0_23] : memref<64x128xf32, #tpu.memory_space<vmem>>, vector<64x128xf32>
    %c0_24 = arith.constant 0 : index
    %c0_25 = arith.constant 0 : index
    %34 = vector.load %arg11[%c0_24, %c0_25] : memref<1x128xf32, #tpu.memory_space<vmem>>, vector<1x128xf32>
    %cst_26 = arith.constant dense<0.000000e+00> : vector<8x128xf32>
    %35 = tpu.matmul %32, %33, %cst_26 {dimension_numbers = #tpu.dot_dimension_numbers<[1], [0], [0], [1], [0, 0, 1, 1], [], []>} : vector<8x64xf32>, vector<64x128xf32>, vector<8x128xf32> -> vector<8x128xf32>
    %36 = vector.broadcast %34 : vector<1x128xf32> to vector<8x128xf32>
    %37 = arith.addf %35, %36 : vector<8x128xf32>
    %38 = math.tanh %37 : vector<8x128xf32>
    %c0_27 = arith.constant 0 : index
    %c0_28 = arith.constant 0 : index
    %39 = vector.load %arg12[%c0_27, %c0_28] : memref<128x96xf32, #tpu.memory_space<vmem>>, vector<128x96xf32>
    %c0_29 = arith.constant 0 : index
    %c0_30 = arith.constant 0 : index
    %40 = vector.load %arg13[%c0_29, %c0_30] : memref<1x96xf32, #tpu.memory_space<vmem>>, vector<1x96xf32>
    %cst_31 = arith.constant dense<0.000000e+00> : vector<8x96xf32>
    %41 = tpu.matmul %38, %39, %cst_31 {dimension_numbers = #tpu.dot_dimension_numbers<[1], [0], [0], [1], [0, 0, 1, 1], [], []>} : vector<8x128xf32>, vector<128x96xf32>, vector<8x96xf32> -> vector<8x96xf32>
    %42 = vector.broadcast %40 : vector<1x96xf32> to vector<8x96xf32>
    %43 = arith.addf %41, %42 : vector<8x96xf32>
    %c0_32 = arith.constant 0 : index
    %c0_33 = arith.constant 0 : index
    %44 = vector.load %arg14[%c0_32, %c0_33] : memref<8x160xf32, #tpu.memory_space<vmem>>, vector<8x96xf32>
    tpu.vector_store %arg14[%c0_32, %c0_33], %43 {strides = array<i32>} : memref<8x160xf32, #tpu.memory_space<vmem>>, vector<8x96xf32>,
    %c0_34 = arith.constant 0 : index
    %c96 = arith.constant 96 : index
    %45 = vector.load %arg14[%c0_34, %c96] : memref<8x160xf32, #tpu.memory_space<vmem>>, vector<8x32xf32>
    tpu.vector_store %arg14[%c0_34, %c96], %18 {strides = array<i32>} : memref<8x160xf32, #tpu.memory_space<vmem>>, vector<8x32xf32>,
    %c0_35 = arith.constant 0 : index
    %c128 = arith.constant 128 : index
    %46 = vector.load %arg14[%c0_35, %c128] : memref<8x160xf32, #tpu.memory_space<vmem>>, vector<8x32xf32>
    tpu.vector_store %arg14[%c0_35, %c128], %26 {strides = array<i32>} : memref<8x160xf32, #tpu.memory_space<vmem>>, vector<8x32xf32>,
    return
  }
  func.func @transform_0(%arg0: i32) -> (i32, i32) {
    %c0_i32 = arith.constant 0 : i32
    %c0_i32_0 = arith.constant 0 : i32
    return %arg0, %c0_i32 : i32, i32
  }
  func.func @transform_1(%arg0: i32) -> (i32, i32) {
    %c0_i32 = arith.constant 0 : i32
    %c0_i32_0 = arith.constant 0 : i32
    %c0_i32_1 = arith.constant 0 : i32
    return %c0_i32, %c0_i32_0 : i32, i32
  }
  func.func @transform_2(%arg0: i32) -> (i32, i32) {
    %c0_i32 = arith.constant 0 : i32
    %c0_i32_0 = arith.constant 0 : i32
    %c0_i32_1 = arith.constant 0 : i32
    return %c0_i32, %c0_i32_0 : i32, i32
  }
  func.func @transform_3(%arg0: i32) -> (i32, i32) {
    %c0_i32 = arith.constant 0 : i32
    %c0_i32_0 = arith.constant 0 : i32
    %c0_i32_1 = arith.constant 0 : i32
    return %c0_i32, %c0_i32_0 : i32, i32
  }
  func.func @transform_4(%arg0: i32) -> (i32, i32) {
    %c0_i32 = arith.constant 0 : i32
    %c0_i32_0 = arith.constant 0 : i32
    %c0_i32_1 = arith.constant 0 : i32
    return %c0_i32, %c0_i32_0 : i32, i32
  }
  func.func @transform_5(%arg0: i32) -> (i32, i32) {
    %c0_i32 = arith.constant 0 : i32
    %c0_i32_0 = arith.constant 0 : i32
    %c0_i32_1 = arith.constant 0 : i32
    return %c0_i32, %c0_i32_0 : i32, i32
  }
  func.func @transform_6(%arg0: i32) -> (i32, i32) {
    %c0_i32 = arith.constant 0 : i32
    %c0_i32_0 = arith.constant 0 : i32
    %c0_i32_1 = arith.constant 0 : i32
    return %c0_i32, %c0_i32_0 : i32, i32
  }
  func.func @transform_7(%arg0: i32) -> (i32, i32) {
    %c0_i32 = arith.constant 0 : i32
    %c0_i32_0 = arith.constant 0 : i32
    %c0_i32_1 = arith.constant 0 : i32
    return %c0_i32, %c0_i32_0 : i32, i32
  }
  func.func @transform_8(%arg0: i32) -> (i32, i32) {
    %c0_i32 = arith.constant 0 : i32
    %c0_i32_0 = arith.constant 0 : i32
    %c0_i32_1 = arith.constant 0 : i32
    return %c0_i32, %c0_i32_0 : i32, i32
  }
  func.func @transform_9(%arg0: i32) -> (i32, i32) {
    %c0_i32 = arith.constant 0 : i32
    %c0_i32_0 = arith.constant 0 : i32
    %c0_i32_1 = arith.constant 0 : i32
    return %c0_i32, %c0_i32_0 : i32, i32
  }
  func.func @transform_10(%arg0: i32) -> (i32, i32) {
    %c0_i32 = arith.constant 0 : i32
    %c0_i32_0 = arith.constant 0 : i32
    %c0_i32_1 = arith.constant 0 : i32
    return %c0_i32, %c0_i32_0 : i32, i32
  }
  func.func @transform_11(%arg0: i32) -> (i32, i32) {
    %c0_i32 = arith.constant 0 : i32
    %c0_i32_0 = arith.constant 0 : i32
    %c0_i32_1 = arith.constant 0 : i32
    return %c0_i32, %c0_i32_0 : i32, i32
  }
  func.func @transform_12(%arg0: i32) -> (i32, i32) {
    %c0_i32 = arith.constant 0 : i32
    %c0_i32_0 = arith.constant 0 : i32
    %c0_i32_1 = arith.constant 0 : i32
    return %c0_i32, %c0_i32_0 : i32, i32
  }
  func.func @transform_13(%arg0: i32) -> (i32, i32) {
    %c0_i32 = arith.constant 0 : i32
    %c0_i32_0 = arith.constant 0 : i32
    return %arg0, %c0_i32 : i32, i32
  }
}

</mosaic_0001>

<llo_original>
// kernel: tpu_custom_call.1
$region0: #{tpu_custom_call.1}
  #allocation0 [shape = 'u32[]', space=smem, size = 0x4, offset = 0x4, fixed_abs, tag = 'smem constant byte address 0x4 - core index']
  #allocation1 [shape = 'u32[144,128]{1,0:T(1,128)}', space=vmem, size = 0x12000, scoped, tag = 'internal scratch']
  %s0 = inlined_call_operand.vmem [shape: f32[8,96], index: 0, kind: input, shape index: {}]
  %s1 = inlined_call_operand.vmem [shape: f32[96,128], index: 1, kind: input, shape index: {}]
  %s2 = inlined_call_operand.vmem [shape: f32[1,128], index: 2, kind: input, shape index: {}]
  %s3 = inlined_call_operand.vmem [shape: f32[128,64], index: 3, kind: input, shape index: {}]
  %s4 = inlined_call_operand.vmem [shape: f32[1,64], index: 4, kind: input, shape index: {}]
  %s5 = inlined_call_operand.vmem [shape: f32[64,64], index: 5, kind: input, shape index: {}]
  %s6 = inlined_call_operand.vmem [shape: f32[1,64], index: 6, kind: input, shape index: {}]
  %s7 = inlined_call_operand.vmem [shape: f32[32,64], index: 7, kind: input, shape index: {}]
  %s8 = inlined_call_operand.vmem [shape: f32[1,64], index: 8, kind: input, shape index: {}]
  %s9 = inlined_call_operand.vmem [shape: f32[64,128], index: 9, kind: input, shape index: {}]
  %s10 = inlined_call_operand.vmem [shape: f32[1,128], index: 10, kind: input, shape index: {}]
  %s11 = inlined_call_operand.vmem [shape: f32[128,96], index: 11, kind: input, shape index: {}]
  %s12 = inlined_call_operand.vmem [shape: f32[1,96], index: 12, kind: input, shape index: {}]
  %s13 = inlined_call_operand.hbm [shape: f32[8,160], index: 13, kind: output, shape index: {}]
  %s14 = sld [smem:[#allocation0]]
  $region62: #{tpu_custom_call.1} parent=0
    _
  %s16 = ssub.s32 1, %s14
  %s17 = scalar_select 0, %s16, %s14
  $region1: #{tpu_custom_call.1} parent=0
    #allocation2 [shape = 'u8[8192]{0}', space=vmem, size = 0x2000, scoped, tag = 'output window, operand 0, single buffered']
    #allocation3 [shape = 's32[1]{0}', space=sflag, size = 0x4, scoped, tag = 'scoped memory for tpu_custom_call.1']
    %18 = vsyncpa [#allocation3], 0
    // Predicated region
    $region2: #{tpu_custom_call.1} parent=1 // pred_check
      _
    $region3: #{tpu_custom_call.1} parent=1 // pred_check_branch
      %20 = sbr.rel (0) target = $region5
    $region4: #{tpu_custom_call.1} parent=1 // pred_region
      _
    $region5: #{tpu_custom_call.1} parent=1 // pred_fallthru
      _
    // Predicated region
    $region6: #{tpu_custom_call.1} parent=1 // pred_check
      _
    $region7: #{tpu_custom_call.1} parent=1 // pred_check_branch
      %22 = sbr.rel (0) target = $region9
    $region8: #{tpu_custom_call.1} parent=1 // pred_region
      _
    $region9: #{tpu_custom_call.1} parent=1 // pred_fallthru
      _
    // Predicated region
    $region10: #{tpu_custom_call.1} parent=1 // pred_check
      _
    $region11: #{tpu_custom_call.1} parent=1 // pred_check_branch
      %24 = sbr.rel (0) target = $region13
    $region12: #{tpu_custom_call.1} parent=1 // pred_region
      _
    $region13: #{tpu_custom_call.1} parent=1 // pred_fallthru
      _
    // Predicated region
    $region14: #{tpu_custom_call.1} parent=1 // pred_check
      _
    $region15: #{tpu_custom_call.1} parent=1 // pred_check_branch
      %26 = sbr.rel (0) target = $region17
    $region16: #{tpu_custom_call.1} parent=1 // pred_region
      _
    $region17: #{tpu_custom_call.1} parent=1 // pred_fallthru
      _
    // Predicated region
    $region18: #{tpu_custom_call.1} parent=1 // pred_check
      _
    $region19: #{tpu_custom_call.1} parent=1 // pred_check_branch
      %28 = sbr.rel (0) target = $region21
    $region20: #{tpu_custom_call.1} parent=1 // pred_region
      _
    $region21: #{tpu_custom_call.1} parent=1 // pred_fallthru
      _
    // Predicated region
    $region22: #{tpu_custom_call.1} parent=1 // pred_check
      _
    $region23: #{tpu_custom_call.1} parent=1 // pred_check_branch
      %30 = sbr.rel (0) target = $region25
    $region24: #{tpu_custom_call.1} parent=1 // pred_region
      _
    $region25: #{tpu_custom_call.1} parent=1 // pred_fallthru
      _
    // Predicated region
    $region26: #{tpu_custom_call.1} parent=1 // pred_check
      _
    $region27: #{tpu_custom_call.1} parent=1 // pred_check_branch
      %32 = sbr.rel (0) target = $region29
    $region28: #{tpu_custom_call.1} parent=1 // pred_region
      _
    $region29: #{tpu_custom_call.1} parent=1 // pred_fallthru
      _
    // Predicated region
    $region30: #{tpu_custom_call.1} parent=1 // pred_check
      _
    $region31: #{tpu_custom_call.1} parent=1 // pred_check_branch
      %34 = sbr.rel (0) target = $region33
    $region32: #{tpu_custom_call.1} parent=1 // pred_region
      _
    $region33: #{tpu_custom_call.1} parent=1 // pred_fallthru
      _
    // Predicated region
    $region34: #{tpu_custom_call.1} parent=1 // pred_check
      _
    $region35: #{tpu_custom_call.1} parent=1 // pred_check_branch
      %36 = sbr.rel (0) target = $region37
    $region36: #{tpu_custom_call.1} parent=1 // pred_region
      _
    $region37: #{tpu_custom_call.1} parent=1 // pred_fallthru
      _
    // Predicated region
    $region38: #{tpu_custom_call.1} parent=1 // pred_check
      _
    $region39: #{tpu_custom_call.1} parent=1 // pred_check_branch
      %38 = sbr.rel (0) target = $region41
    $region40: #{tpu_custom_call.1} parent=1 // pred_region
      _
    $region41: #{tpu_custom_call.1} parent=1 // pred_fallthru
      _
    // Predicated region
    $region42: #{tpu_custom_call.1} parent=1 // pred_check
      _
    $region43: #{tpu_custom_call.1} parent=1 // pred_check_branch
      %40 = sbr.rel (0) target = $region45
    $region44: #{tpu_custom_call.1} parent=1 // pred_region
      _
    $region45: #{tpu_custom_call.1} parent=1 // pred_fallthru
      _
    // Predicated region
    $region46: #{tpu_custom_call.1} parent=1 // pred_check
      _
    $region47: #{tpu_custom_call.1} parent=1 // pred_check_branch
      %42 = sbr.rel (0) target = $region49
    $region48: #{tpu_custom_call.1} parent=1 // pred_region
      _
    $region49: #{tpu_custom_call.1} parent=1 // pred_fallthru
      _
    // Predicated region
    $region50: #{tpu_custom_call.1} parent=1 // pred_check
      _
    $region51: #{tpu_custom_call.1} parent=1 // pred_check_branch
      %44 = sbr.rel (0) target = $region53
    $region52: #{tpu_custom_call.1} parent=1 // pred_region
      _
    $region53: #{tpu_custom_call.1} parent=1 // pred_fallthru
      _
    %v45 = vld [vmem:[%s0] sm:$0xff]
    %v46 = vld [vmem:[%s1] sm:$0xff]
    %v47 = vld [vmem:[%s1 + $0x8] sm:$0xff]
    %v48 = vld [vmem:[%s1 + $0x10] sm:$0xff]
    %v49 = vld [vmem:[%s1 + $0x18] sm:$0xff]
    %v50 = vld [vmem:[%s1 + $0x20] sm:$0xff]
    %v51 = vld [vmem:[%s1 + $0x28] sm:$0xff]
    %v52 = vld [vmem:[%s1 + $0x30] sm:$0xff]
    %v53 = vld [vmem:[%s1 + $0x38] sm:$0xff]
    %v54 = vld [vmem:[%s1 + $0x40] sm:$0xff]
    %v55 = vld [vmem:[%s1 + $0x48] sm:$0xff]
    %v56 = vld [vmem:[%s1 + $0x50] sm:$0xff]
    %v57 = vld [vmem:[%s1 + $0x58] sm:$0xff]
    %v58 = vld [vmem:[%s2] sm:$0x1]
    %v60 = vlaneseq
    %v61 = vshrl.u32 %v60, 7
    %v62 = vsub.s32 0, %v61
    %v63 = vrot.slane %v58, %v62
    %vm65 = vcmask 785408
    %v67 = vsel %vm65, %v45, 0
    %69 = vmatprep.subr.mxu0 0.0
    %70 = vmatpush1.msra.mxu0 0.0
    %71 = vmatprep.subr.mxu0 0.0
    %72 = vmatpush1.msra.mxu0 0.0
    %73 = vmatprep.subr.mxu0 0.0
    %74 = vmatpush1.msra.mxu0 0.0
    %75 = vmatprep.subr.mxu0 0.0
    %76 = vmatpush1.msra.mxu0 0.0
    %77 = vmatprep.subr.mxu0 0.0
    %78 = vmatpush1.msra.mxu0 %v57
    %79 = vmatprep.subr.mxu0 0.0
    %80 = vmatpush1.msra.mxu0 %v56
    %81 = vmatprep.subr.mxu0 0.0
    %82 = vmatpush1.msra.mxu0 %v55
    %83 = vmatprep.subr.mxu0 0.0
    %84 = vmatpush1.msra.mxu0 %v54
    %85 = vmatprep.subr.mxu0 0.0
    %86 = vmatpush1.msra.mxu0 %v53
    %87 = vmatprep.subr.mxu0 0.0
    %88 = vmatpush1.msra.mxu0 %v52
    %89 = vmatprep.subr.mxu0 0.0
    %90 = vmatpush1.msra.mxu0 %v51
    %91 = vmatprep.subr.mxu0 0.0
    %92 = vmatpush1.msra.mxu0 %v50
    %93 = vmatprep.subr.mxu0 0.0
    %94 = vmatpush1.msra.mxu0 %v49
    %95 = vmatprep.subr.mxu0 0.0
    %96 = vmatpush1.msra.mxu0 %v48
    %97 = vmatprep.subr.mxu0 0.0
    %98 = vmatpush1.msra.mxu0 %v47
    %99 = vmatprep.subr.mxu0 0.0
    %100 = vmatpush1.msra.mxu0 %v46
    %101 = vmatprep.subr.mxu0 0.0
    %102 = vmatpush2.msra.mxu0 0.0
    %103 = vmatprep.subr.mxu0 0.0
    %104 = vmatpush2.msra.mxu0 0.0
    %105 = vmatprep.subr.mxu0 0.0
    %106 = vmatpush2.msra.mxu0 0.0
    %107 = vmatprep.subr.mxu0 0.0
    %108 = vmatpush2.msra.mxu0 0.0
    %109 = vmatprep.subr.mxu0 0.0
    %110 = vmatpush2.msra.mxu0 0.0
    %111 = vmatprep.subr.mxu0 0.0
    %112 = vmatpush2.msra.mxu0 0.0
    %113 = vmatprep.subr.mxu0 0.0
    %114 = vmatpush2.msra.mxu0 0.0
    %115 = vmatprep.subr.mxu0 0.0
    %116 = vmatpush2.msra.mxu0 0.0
    %117 = vmatprep.subr.mxu0 0.0
    %118 = vmatpush2.msra.mxu0 0.0
    %119 = vmatprep.subr.mxu0 0.0
    %120 = vmatpush2.msra.mxu0 0.0
    %121 = vmatprep.subr.mxu0 0.0
    %122 = vmatpush2.msra.mxu0 0.0
    %123 = vmatprep.subr.mxu0 0.0
    %124 = vmatpush2.msra.mxu0 0.0
    %125 = vmatprep.subr.mxu0 0.0
    %126 = vmatpush2.msra.mxu0 0.0
    %127 = vmatprep.subr.mxu0 0.0
    %128 = vmatpush2.msra.mxu0 0.0
    %129 = vmatprep.subr.mxu0 0.0
    %130 = vmatpush2.msra.mxu0 0.0
    %131 = vmatprep.subr.mxu0 0.0
    %132 = vmatpush2.msra.mxu0 0.0
    %133 = vmatprep.mubr.f32.mxu0 0.0
    %134 = vmatmul.mubr.f32.gmra.mxu0 %v67
    %v135 = vpop.f32.mrf.mxu0
    %v136 = vadd.f32 %v63, %v135
    %v137 = vpop.f32.mrf.mxu0
    %138 = vdwg.mxu0
    %v139 = vtanh.pop %v136
    %v140 = vld [vmem:[%s3] sm:$0xff]
    %v141 = vld [vmem:[%s3 + $0x8] sm:$0xff]
    %v142 = vld [vmem:[%s3 + $0x10] sm:$0xff]
    %v143 = vld [vmem:[%s3 + $0x18] sm:$0xff]
    %v144 = vld [vmem:[%s3 + $0x20] sm:$0xff]
    %v145 = vld [vmem:[%s3 + $0x28] sm:$0xff]
    %v146 = vld [vmem:[%s3 + $0x30] sm:$0xff]
    %v147 = vld [vmem:[%s3 + $0x38] sm:$0xff]
    %v148 = vld [vmem:[%s3 + $0x40] sm:$0xff]
    %v149 = vld [vmem:[%s3 + $0x48] sm:$0xff]
    %v150 = vld [vmem:[%s3 + $0x50] sm:$0xff]
    %v151 = vld [vmem:[%s3 + $0x58] sm:$0xff]
    %v152 = vld [vmem:[%s3 + $0x60] sm:$0xff]
    %v153 = vld [vmem:[%s3 + $0x68] sm:$0xff]
    %v154 = vld [vmem:[%s3 + $0x70] sm:$0xff]
    %v155 = vld [vmem:[%s3 + $0x78] sm:$0xff]
    %v156 = vld [vmem:[%s4] sm:$0x1]
    %v158 = vlaneseq
    %v159 = vshrl.u32 %v158, 7
    %v160 = vsub.s32 0, %v159
    %v161 = vrot.slane %v156, %v160
    %163 = vmatprep.subr.mxu0 0.0
    %164 = vmatpush1.msra.mxu0 %v155
    %165 = vmatprep.subr.mxu0 0.0
    %166 = vmatpush1.msra.mxu0 %v154
    %167 = vmatprep.subr.mxu0 0.0
    %168 = vmatpush1.msra.mxu0 %v153
    %169 = vmatprep.subr.mxu0 0.0
    %170 = vmatpush1.msra.mxu0 %v152
    %171 = vmatprep.subr.mxu0 0.0
    %172 = vmatpush1.msra.mxu0 %v151
    %173 = vmatprep.subr.mxu0 0.0
    %174 = vmatpush1.msra.mxu0 %v150
    %175 = vmatprep.subr.mxu0 0.0
    %176 = vmatpush1.msra.mxu0 %v149
    %177 = vmatprep.subr.mxu0 0.0
    %178 = vmatpush1.msra.mxu0 %v148
    %179 = vmatprep.subr.mxu0 0.0
    %180 = vmatpush1.msra.mxu0 %v147
    %181 = vmatprep.subr.mxu0 0.0
    %182 = vmatpush1.msra.mxu0 %v146
    %183 = vmatprep.subr.mxu0 0.0
    %184 = vmatpush1.msra.mxu0 %v145
    %185 = vmatprep.subr.mxu0 0.0
    %186 = vmatpush1.msra.mxu0 %v144
    %187 = vmatprep.subr.mxu0 0.0
    %188 = vmatpush1.msra.mxu0 %v143
    %189 = vmatprep.subr.mxu0 0.0
    %190 = vmatpush1.msra.mxu0 %v142
    %191 = vmatprep.subr.mxu0 0.0
    %192 = vmatpush1.msra.mxu0 %v141
    %193 = vmatprep.subr.mxu0 0.0
    %194 = vmatpush1.msra.mxu0 %v140
    %195 = vmatprep.subr.mxu0 0.0
    %196 = vmatpush2.msra.mxu0 0.0
    %197 = vmatprep.subr.mxu0 0.0
    %198 = vmatpush2.msra.mxu0 0.0
    %199 = vmatprep.subr.mxu0 0.0
    %200 = vmatpush2.msra.mxu0 0.0
    %201 = vmatprep.subr.mxu0 0.0
    %202 = vmatpush2.msra.mxu0 0.0
    %203 = vmatprep.subr.mxu0 0.0
    %204 = vmatpush2.msra.mxu0 0.0
    %205 = vmatprep.subr.mxu0 0.0
    %206 = vmatpush2.msra.mxu0 0.0
    %207 = vmatprep.subr.mxu0 0.0
    %208 = vmatpush2.msra.mxu0 0.0
    %209 = vmatprep.subr.mxu0 0.0
    %210 = vmatpush2.msra.mxu0 0.0
    %211 = vmatprep.subr.mxu0 0.0
    %212 = vmatpush2.msra.mxu0 0.0
    %213 = vmatprep.subr.mxu0 0.0
    %214 = vmatpush2.msra.mxu0 0.0
    %215 = vmatprep.subr.mxu0 0.0
    %216 = vmatpush2.msra.mxu0 0.0
    %217 = vmatprep.subr.mxu0 0.0
    %218 = vmatpush2.msra.mxu0 0.0
    %219 = vmatprep.subr.mxu0 0.0
    %220 = vmatpush2.msra.mxu0 0.0
    %221 = vmatprep.subr.mxu0 0.0
    %222 = vmatpush2.msra.mxu0 0.0
    %223 = vmatprep.subr.mxu0 0.0
    %224 = vmatpush2.msra.mxu0 0.0
    %225 = vmatprep.subr.mxu0 0.0
    %226 = vmatpush2.msra.mxu0 0.0
    %227 = vmatprep.mubr.f32.mxu0 0.0
    %228 = vmatmul.mubr.f32.gmra.mxu0 %v139
    %v229 = vpop.f32.mrf.mxu0
    %v230 = vadd.f32 %v161, %v229
    %v231 = vpop.f32.mrf.mxu0
    %232 = vdwg.mxu0
    %v233 = vtanh.pop %v230
    %v234 = vld [vmem:[%s5] sm:$0xff]
    %v235 = vld [vmem:[%s5 + $0x8] sm:$0xff]
    %v236 = vld [vmem:[%s5 + $0x10] sm:$0xff]
    %v237 = vld [vmem:[%s5 + $0x18] sm:$0xff]
    %v238 = vld [vmem:[%s5 + $0x20] sm:$0xff]
    %v239 = vld [vmem:[%s5 + $0x28] sm:$0xff]
    %v240 = vld [vmem:[%s5 + $0x30] sm:$0xff]
    %v241 = vld [vmem:[%s5 + $0x38] sm:$0xff]
    %v242 = vld [vmem:[%s6] sm:$0x1]
    %v244 = vlaneseq
    %v245 = vshrl.u32 %v244, 7
    %v246 = vsub.s32 0, %v245
    %v247 = vrot.slane %v242, %v246
    %vm249 = vcmask 523264
    %v251 = vsel %vm249, %v233, 0
    %253 = vmatprep.subr.mxu0 0.0
    %254 = vmatpush1.msra.mxu0 0.0
    %255 = vmatprep.subr.mxu0 0.0
    %256 = vmatpush1.msra.mxu0 0.0
    %257 = vmatprep.subr.mxu0 0.0
    %258 = vmatpush1.msra.mxu0 0.0
    %259 = vmatprep.subr.mxu0 0.0
    %260 = vmatpush1.msra.mxu0 0.0
    %261 = vmatprep.subr.mxu0 0.0
    %262 = vmatpush1.msra.mxu0 0.0
    %263 = vmatprep.subr.mxu0 0.0
    %264 = vmatpush1.msra.mxu0 0.0
    %265 = vmatprep.subr.mxu0 0.0
    %266 = vmatpush1.msra.mxu0 0.0
    %267 = vmatprep.subr.mxu0 0.0
    %268 = vmatpush1.msra.mxu0 0.0
    %269 = vmatprep.subr.mxu0 0.0
    %270 = vmatpush1.msra.mxu0 %v241
    %271 = vmatprep.subr.mxu0 0.0
    %272 = vmatpush1.msra.mxu0 %v240
    %273 = vmatprep.subr.mxu0 0.0
    %274 = vmatpush1.msra.mxu0 %v239
    %275 = vmatprep.subr.mxu0 0.0
    %276 = vmatpush1.msra.mxu0 %v238
    %277 = vmatprep.subr.mxu0 0.0
    %278 = vmatpush1.msra.mxu0 %v237
    %279 = vmatprep.subr.mxu0 0.0
    %280 = vmatpush1.msra.mxu0 %v236
    %281 = vmatprep.subr.mxu0 0.0
    %282 = vmatpush1.msra.mxu0 %v235
    %283 = vmatprep.subr.mxu0 0.0
    %284 = vmatpush1.msra.mxu0 %v234
    %285 = vmatprep.subr.mxu0 0.0
    %286 = vmatpush2.msra.mxu0 0.0
    %287 = vmatprep.subr.mxu0 0.0
    %288 = vmatpush2.msra.mxu0 0.0
    %289 = vmatprep.subr.mxu0 0.0
    %290 = vmatpush2.msra.mxu0 0.0
    %291 = vmatprep.subr.mxu0 0.0
    %292 = vmatpush2.msra.mxu0 0.0
    %293 = vmatprep.subr.mxu0 0.0
    %294 = vmatpush2.msra.mxu0 0.0
    %295 = vmatprep.subr.mxu0 0.0
    %296 = vmatpush2.msra.mxu0 0.0
    %297 = vmatprep.subr.mxu0 0.0
    %298 = vmatpush2.msra.mxu0 0.0
    %299 = vmatprep.subr.mxu0 0.0
    %300 = vmatpush2.msra.mxu0 0.0
    %301 = vmatprep.subr.mxu0 0.0
    %302 = vmatpush2.msra.mxu0 0.0
    %303 = vmatprep.subr.mxu0 0.0
    %304 = vmatpush2.msra.mxu0 0.0
    %305 = vmatprep.subr.mxu0 0.0
    %306 = vmatpush2.msra.mxu0 0.0
    %307 = vmatprep.subr.mxu0 0.0
    %308 = vmatpush2.msra.mxu0 0.0
    %309 = vmatprep.subr.mxu0 0.0
    %310 = vmatpush2.msra.mxu0 0.0
    %311 = vmatprep.subr.mxu0 0.0
    %312 = vmatpush2.msra.mxu0 0.0
    %313 = vmatprep.subr.mxu0 0.0
    %314 = vmatpush2.msra.mxu0 0.0
    %315 = vmatprep.subr.mxu0 0.0
    %316 = vmatpush2.msra.mxu0 0.0
    %317 = vmatprep.mubr.f32.mxu0 0.0
    %318 = vmatmul.mubr.f32.gmra.mxu0 %v251
    %v319 = vpop.f32.mrf.mxu0
    %v320 = vadd.f32 %v247, %v319
    %v321 = vpop.f32.mrf.mxu0
    %322 = vdwg.mxu0
    %vm323 = vcmp.gt.f32.partialorder %v320, 20.0
    %v324 = vmin.f32 %v320, 20.0
    %v325 = vmul.f32 %v324, 1.442695
    %v326 = vpow.pop %v325
    %v327 = vadd.f32 %v326, 1.0
    %v328 = vlog2.pop %v327
    %v329 = vmul.f32 %v328, 0.6931472
    %v330 = vmul.f32 -0.5, %v326
    %v331 = vadd.f32 %v330, 1.0
    %v332 = vmul.f32 %v331, %v326
    %v333 = vand.u32 2147483647, %v326
    %vm334 = vcmp.lt.f32.partialorder %v333, 0.0004427343
    %v335 = vsel %vm334, %v332, %v329
    %v336 = vsel %vm323, %v320, %v335
    %v337 = vld [vmem:[%s7] sm:$0xff]
    %v338 = vld [vmem:[%s7 + $0x8] sm:$0xff]
    %v339 = vld [vmem:[%s7 + $0x10] sm:$0xff]
    %v340 = vld [vmem:[%s7 + $0x18] sm:$0xff]
    %v341 = vld [vmem:[%s8] sm:$0x1]
    %v343 = vlaneseq
    %v344 = vshrl.u32 %v343, 7
    %v345 = vsub.s32 0, %v344
    %v346 = vrot.slane %v341, %v345
    %vm348 = vcmask 261120
    %v350 = vsel %vm348, %v320, 0
    %352 = vmatprep.subr.mxu0 0.0
    %353 = vmatpush1.msra.mxu0 0.0
    %354 = vmatprep.subr.mxu0 0.0
    %355 = vmatpush1.msra.mxu0 0.0
    %356 = vmatprep.subr.mxu0 0.0
    %357 = vmatpush1.msra.mxu0 0.0
    %358 = vmatprep.subr.mxu0 0.0
    %359 = vmatpush1.msra.mxu0 0.0
    %360 = vmatprep.subr.mxu0 0.0
    %361 = vmatpush1.msra.mxu0 0.0
    %362 = vmatprep.subr.mxu0 0.0
    %363 = vmatpush1.msra.mxu0 0.0
    %364 = vmatprep.subr.mxu0 0.0
    %365 = vmatpush1.msra.mxu0 0.0
    %366 = vmatprep.subr.mxu0 0.0
    %367 = vmatpush1.msra.mxu0 0.0
    %368 = vmatprep.subr.mxu0 0.0
    %369 = vmatpush1.msra.mxu0 0.0
    %370 = vmatprep.subr.mxu0 0.0
    %371 = vmatpush1.msra.mxu0 0.0
    %372 = vmatprep.subr.mxu0 0.0
    %373 = vmatpush1.msra.mxu0 0.0
    %374 = vmatprep.subr.mxu0 0.0
    %375 = vmatpush1.msra.mxu0 0.0
    %376 = vmatprep.subr.mxu0 0.0
    %377 = vmatpush1.msra.mxu0 %v340
    %378 = vmatprep.subr.mxu0 0.0
    %379 = vmatpush1.msra.mxu0 %v339
    %380 = vmatprep.subr.mxu0 0.0
    %381 = vmatpush1.msra.mxu0 %v338
    %382 = vmatprep.subr.mxu0 0.0
    %383 = vmatpush1.msra.mxu0 %v337
    %384 = vmatprep.subr.mxu0 0.0
    %385 = vmatpush2.msra.mxu0 0.0
    %386 = vmatprep.subr.mxu0 0.0
    %387 = vmatpush2.msra.mxu0 0.0
    %388 = vmatprep.subr.mxu0 0.0
    %389 = vmatpush2.msra.mxu0 0.0
    %390 = vmatprep.subr.mxu0 0.0
    %391 = vmatpush2.msra.mxu0 0.0
    %392 = vmatprep.subr.mxu0 0.0
    %393 = vmatpush2.msra.mxu0 0.0
    %394 = vmatprep.subr.mxu0 0.0
    %395 = vmatpush2.msra.mxu0 0.0
    %396 = vmatprep.subr.mxu0 0.0
    %397 = vmatpush2.msra.mxu0 0.0
    %398 = vmatprep.subr.mxu0 0.0
    %399 = vmatpush2.msra.mxu0 0.0
    %400 = vmatprep.subr.mxu0 0.0
    %401 = vmatpush2.msra.mxu0 0.0
    %402 = vmatprep.subr.mxu0 0.0
    %403 = vmatpush2.msra.mxu0 0.0
    %404 = vmatprep.subr.mxu0 0.0
    %405 = vmatpush2.msra.mxu0 0.0
    %406 = vmatprep.subr.mxu0 0.0
    %407 = vmatpush2.msra.mxu0 0.0
    %408 = vmatprep.subr.mxu0 0.0
    %409 = vmatpush2.msra.mxu0 0.0
    %410 = vmatprep.subr.mxu0 0.0
    %411 = vmatpush2.msra.mxu0 0.0
    %412 = vmatprep.subr.mxu0 0.0
    %413 = vmatpush2.msra.mxu0 0.0
    %414 = vmatprep.subr.mxu0 0.0
    %415 = vmatpush2.msra.mxu0 0.0
    %416 = vmatprep.mubr.f32.mxu0 0.0
    %417 = vmatmul.mubr.f32.gmra.mxu0 %v350
    %v418 = vpop.f32.mrf.mxu0
    %v419 = vadd.f32 %v346, %v418
    %v420 = vpop.f32.mrf.mxu0
    %421 = vdwg.mxu0
    %v422 = vtanh.pop %v419
    %v423 = vld [vmem:[%s9] sm:$0xff]
    %v424 = vld [vmem:[%s9 + $0x8] sm:$0xff]
    %v425 = vld [vmem:[%s9 + $0x10] sm:$0xff]
    %v426 = vld [vmem:[%s9 + $0x18] sm:$0xff]
    %v427 = vld [vmem:[%s9 + $0x20] sm:$0xff]
    %v428 = vld [vmem:[%s9 + $0x28] sm:$0xff]
    %v429 = vld [vmem:[%s9 + $0x30] sm:$0xff]
    %v430 = vld [vmem:[%s9 + $0x38] sm:$0xff]
    %v431 = vld [vmem:[%s10] sm:$0x1]
    %v433 = vlaneseq
    %v434 = vshrl.u32 %v433, 7
    %v435 = vsub.s32 0, %v434
    %v436 = vrot.slane %v431, %v435
    %v439 = vsel %vm249, %v422, 0
    %441 = vmatprep.subr.mxu0 0.0
    %442 = vmatpush1.msra.mxu0 0.0
    %443 = vmatprep.subr.mxu0 0.0
    %444 = vmatpush1.msra.mxu0 0.0
    %445 = vmatprep.subr.mxu0 0.0
    %446 = vmatpush1.msra.mxu0 0.0
    %447 = vmatprep.subr.mxu0 0.0
    %448 = vmatpush1.msra.mxu0 0.0
    %449 = vmatprep.subr.mxu0 0.0
    %450 = vmatpush1.msra.mxu0 0.0
    %451 = vmatprep.subr.mxu0 0.0
    %452 = vmatpush1.msra.mxu0 0.0
    %453 = vmatprep.subr.mxu0 0.0
    %454 = vmatpush1.msra.mxu0 0.0
    %455 = vmatprep.subr.mxu0 0.0
    %456 = vmatpush1.msra.mxu0 0.0
    %457 = vmatprep.subr.mxu0 0.0
    %458 = vmatpush1.msra.mxu0 %v430
    %459 = vmatprep.subr.mxu0 0.0
    %460 = vmatpush1.msra.mxu0 %v429
    %461 = vmatprep.subr.mxu0 0.0
    %462 = vmatpush1.msra.mxu0 %v428
    %463 = vmatprep.subr.mxu0 0.0
    %464 = vmatpush1.msra.mxu0 %v427
    %465 = vmatprep.subr.mxu0 0.0
    %466 = vmatpush1.msra.mxu0 %v426
    %467 = vmatprep.subr.mxu0 0.0
    %468 = vmatpush1.msra.mxu0 %v425
    %469 = vmatprep.subr.mxu0 0.0
    %470 = vmatpush1.msra.mxu0 %v424
    %471 = vmatprep.subr.mxu0 0.0
    %472 = vmatpush1.msra.mxu0 %v423
    %473 = vmatprep.subr.mxu0 0.0
    %474 = vmatpush2.msra.mxu0 0.0
    %475 = vmatprep.subr.mxu0 0.0
    %476 = vmatpush2.msra.mxu0 0.0
    %477 = vmatprep.subr.mxu0 0.0
    %478 = vmatpush2.msra.mxu0 0.0
    %479 = vmatprep.subr.mxu0 0.0
    %480 = vmatpush2.msra.mxu0 0.0
    %481 = vmatprep.subr.mxu0 0.0
    %482 = vmatpush2.msra.mxu0 0.0
    %483 = vmatprep.subr.mxu0 0.0
    %484 = vmatpush2.msra.mxu0 0.0
    %485 = vmatprep.subr.mxu0 0.0
    %486 = vmatpush2.msra.mxu0 0.0
    %487 = vmatprep.subr.mxu0 0.0
    %488 = vmatpush2.msra.mxu0 0.0
    %489 = vmatprep.subr.mxu0 0.0
    %490 = vmatpush2.msra.mxu0 0.0
    %491 = vmatprep.subr.mxu0 0.0
    %492 = vmatpush2.msra.mxu0 0.0
    %493 = vmatprep.subr.mxu0 0.0
    %494 = vmatpush2.msra.mxu0 0.0
    %495 = vmatprep.subr.mxu0 0.0
    %496 = vmatpush2.msra.mxu0 0.0
    %497 = vmatprep.subr.mxu0 0.0
    %498 = vmatpush2.msra.mxu0 0.0
    %499 = vmatprep.subr.mxu0 0.0
    %500 = vmatpush2.msra.mxu0 0.0
    %501 = vmatprep.subr.mxu0 0.0
    %502 = vmatpush2.msra.mxu0 0.0
    %503 = vmatprep.subr.mxu0 0.0
    %504 = vmatpush2.msra.mxu0 0.0
    %505 = vmatprep.mubr.f32.mxu0 0.0
    %506 = vmatmul.mubr.f32.gmra.mxu0 %v439
    %v507 = vpop.f32.mrf.mxu0
    %v508 = vadd.f32 %v436, %v507
    %v509 = vpop.f32.mrf.mxu0
    %510 = vdwg.mxu0
    %v511 = vtanh.pop %v508
    %v512 = vld [vmem:[%s11] sm:$0xff]
    %v513 = vld [vmem:[%s11 + $0x8] sm:$0xff]
    %v514 = vld [vmem:[%s11 + $0x10] sm:$0xff]
    %v515 = vld [vmem:[%s11 + $0x18] sm:$0xff]
    %v516 = vld [vmem:[%s11 + $0x20] sm:$0xff]
    %v517 = vld [vmem:[%s11 + $0x28] sm:$0xff]
    %v518 = vld [vmem:[%s11 + $0x30] sm:$0xff]
    %v519 = vld [vmem:[%s11 + $0x38] sm:$0xff]
    %v520 = vld [vmem:[%s11 + $0x40] sm:$0xff]
    %v521 = vld [vmem:[%s11 + $0x48] sm:$0xff]
    %v522 = vld [vmem:[%s11 + $0x50] sm:$0xff]
    %v523 = vld [vmem:[%s11 + $0x58] sm:$0xff]
    %v524 = vld [vmem:[%s11 + $0x60] sm:$0xff]
    %v525 = vld [vmem:[%s11 + $0x68] sm:$0xff]
    %v526 = vld [vmem:[%s11 + $0x70] sm:$0xff]
    %v527 = vld [vmem:[%s11 + $0x78] sm:$0xff]
    %v528 = vld [vmem:[%s12] sm:$0x1]
    %v530 = vlaneseq
    %v531 = vshrl.u32 %v530, 7
    %v532 = vsub.s32 0, %v531
    %v533 = vrot.slane %v528, %v532
    %535 = vmatprep.subr.mxu0 0.0
    %536 = vmatpush1.msra.mxu0 %v527
    %537 = vmatprep.subr.mxu0 0.0
    %538 = vmatpush1.msra.mxu0 %v526
    %539 = vmatprep.subr.mxu0 0.0
    %540 = vmatpush1.msra.mxu0 %v525
    %541 = vmatprep.subr.mxu0 0.0
    %542 = vmatpush1.msra.mxu0 %v524
    %543 = vmatprep.subr.mxu0 0.0
    %544 = vmatpush1.msra.mxu0 %v523
    %545 = vmatprep.subr.mxu0 0.0
    %546 = vmatpush1.msra.mxu0 %v522
    %547 = vmatprep.subr.mxu0 0.0
    %548 = vmatpush1.msra.mxu0 %v521
    %549 = vmatprep.subr.mxu0 0.0
    %550 = vmatpush1.msra.mxu0 %v520
    %551 = vmatprep.subr.mxu0 0.0
    %552 = vmatpush1.msra.mxu0 %v519
    %553 = vmatprep.subr.mxu0 0.0
    %554 = vmatpush1.msra.mxu0 %v518
    %555 = vmatprep.subr.mxu0 0.0
    %556 = vmatpush1.msra.mxu0 %v517
    %557 = vmatprep.subr.mxu0 0.0
    %558 = vmatpush1.msra.mxu0 %v516
    %559 = vmatprep.subr.mxu0 0.0
    %560 = vmatpush1.msra.mxu0 %v515
    %561 = vmatprep.subr.mxu0 0.0
    %562 = vmatpush1.msra.mxu0 %v514
    %563 = vmatprep.subr.mxu0 0.0
    %564 = vmatpush1.msra.mxu0 %v513
    %565 = vmatprep.subr.mxu0 0.0
    %566 = vmatpush1.msra.mxu0 %v512
    %567 = vmatprep.subr.mxu0 0.0
    %568 = vmatpush2.msra.mxu0 0.0
    %569 = vmatprep.subr.mxu0 0.0
    %570 = vmatpush2.msra.mxu0 0.0
    %571 = vmatprep.subr.mxu0 0.0
    %572 = vmatpush2.msra.mxu0 0.0
    %573 = vmatprep.subr.mxu0 0.0
    %574 = vmatpush2.msra.mxu0 0.0
    %575 = vmatprep.subr.mxu0 0.0
    %576 = vmatpush2.msra.mxu0 0.0
    %577 = vmatprep.subr.mxu0 0.0
    %578 = vmatpush2.msra.mxu0 0.0
    %579 = vmatprep.subr.mxu0 0.0
    %580 = vmatpush2.msra.mxu0 0.0
    %581 = vmatprep.subr.mxu0 0.0
    %582 = vmatpush2.msra.mxu0 0.0
    %583 = vmatprep.subr.mxu0 0.0
    %584 = vmatpush2.msra.mxu0 0.0
    %585 = vmatprep.subr.mxu0 0.0
    %586 = vmatpush2.msra.mxu0 0.0
    %587 = vmatprep.subr.mxu0 0.0
    %588 = vmatpush2.msra.mxu0 0.0
    %589 = vmatprep.subr.mxu0 0.0
    %590 = vmatpush2.msra.mxu0 0.0
    %591 = vmatprep.subr.mxu0 0.0
    %592 = vmatpush2.msra.mxu0 0.0
    %593 = vmatprep.subr.mxu0 0.0
    %594 = vmatpush2.msra.mxu0 0.0
    %595 = vmatprep.subr.mxu0 0.0
    %596 = vmatpush2.msra.mxu0 0.0
    %597 = vmatprep.subr.mxu0 0.0
    %598 = vmatpush2.msra.mxu0 0.0
    %599 = vmatprep.mubr.f32.mxu0 0.0
    %600 = vmatmul.mubr.f32.gmra.mxu0 %v511
    %v601 = vpop.f32.mrf.mxu0
    %v602 = vadd.f32 %v533, %v601
    %v603 = vpop.f32.mrf.mxu0
    %604 = vdwg.mxu0
    %605 = vst.msk [vmem:[#allocation2] sm:$0xff] %vm65, %v602
    %606 = vrot.lane.b32.xlu0 %v320, 96
    %v607 = vpop.permute.xlu0 %606
    %vm609 = vcmask 1048320
    %610 = vst.msk [vmem:[#allocation2] sm:$0xff] %vm609, %v607
    %612 = vrot.lane.b32.xlu0 %v336, 96
    %v613 = vpop.permute.xlu0 %612
    %615 = vst.msk [vmem:[#allocation2 + $0x8] sm:$0xff] %vm348, %v613
    // Predicated region
    $region54: #{tpu_custom_call.1} parent=1 // pred_check
      _
    $region55: #{tpu_custom_call.1} parent=1 // pred_check_branch
      %617 = sbr.rel (0) target = $region57
    $region56: #{tpu_custom_call.1} parent=1 // pred_region
      %s619 = ssub.s32 256, 256
      %620 = vsyncadd [#allocation3], %s619
      %s622 = sshll.u32 [#allocation2], 4
      %s623 = int_to_ptr.vmem [resolvable:$true] %s622
      %625 = dma.vmem_to_hbm [thread:$0]  %s623, 256, %s13, [#allocation3]
    $region57: #{tpu_custom_call.1} parent=1 // pred_fallthru
      _
    // Predicated region
    $region58: #{tpu_custom_call.1} parent=1 // pred_check
      _
    $region59: #{tpu_custom_call.1} parent=1 // pred_check_branch
      %627 = sbr.rel (0) target = $region61
    $region60: #{tpu_custom_call.1} parent=1 // pred_region
      %628 = dma.done [#allocation3], 256
    $region61: #{tpu_custom_call.1} parent=1 // pred_fallthru
      _
    %629 = vsyncpa [#allocation3], 1

</llo_original>
